<compile_context>
chip_gen: v7x
topology: tpu7x:2x2x1
jax: 0.10.0
libtpu: 0.0.40
codegen_flags: <defaults>
</compile_context>

<pallas_src>
import jax
import jax.numpy as jnp
from jax import lax
from jax.experimental import pallas as pl
from jax.experimental.pallas import tpu as pltpu

HIDDEN = 30            # real hidden width of the module
H_PAD = 128            # hidden width padded to a full lane dimension
ONE_COL = H_PAD - 1    # column carrying a constant 1.0 (bias folding)


def _round_up(a, m):
    return (a + m - 1) // m * m


# -----------------------------------------------------------------------------
# Kernel: one batch tile of the 3-layer value MLP.
# -----------------------------------------------------------------------------
def value_mlp_kernel(x_ref, w1_ref, w2_ref, w3_ref, b1_ref, out_ref):
    # x_ref  : (TB, S)      f32  — state at natural width (no lane padding).
    # w1_ref : (S, 128)     bf16 — fc1 weight (cols >= HIDDEN are zero).
    # w2_ref : (128, 128)   bf16 — fc2 weight (+b2 in row ONE_COL, +1 on diag).
    # w3_ref : (128, 1)     bf16 — value-head weight column (+b3 at ONE_COL).
    # b1_ref : (1, 128)     f32  — fc1 bias row; b1[ONE_COL] == 1.0 feeds the
    #                              ones column used to fold b2 / b3.
    # out_ref: (TB, 1)      f32  — per-example value.
    xb = x_ref[...].astype(jnp.bfloat16)

    # fc1 + bias + ReLU  (f32 accumulation; bias added in f32 before ReLU)
    h1 = jnp.dot(xb, w1_ref[...], preferred_element_type=jnp.float32)
    h1 = jnp.maximum(h1 + b1_ref[...], 0.0)         # (TB,128); col ONE_COL == 1

    # fc2 + ReLU  (b2 folded in via the ones column of h1)
    h2 = jnp.dot(h1.astype(jnp.bfloat16), w2_ref[...],
                 preferred_element_type=jnp.float32)
    h2 = jnp.maximum(h2, 0.0)                        # (TB,128); col ONE_COL == 1

    # value head: plain (TB,128)x(128,1) bf16 MXU matmul, no transposes.
    out_ref[...] = jnp.dot(h2.astype(jnp.bfloat16), w3_ref[...],
                           preferred_element_type=jnp.float32)


# -----------------------------------------------------------------------------
# Pure-jnp fallback with the same numerics (for tiny batches, opt-in).
# -----------------------------------------------------------------------------
def _value_forward_jnp(x, packed):
    xb = x.astype(jnp.bfloat16)
    h1 = jnp.maximum(
        jnp.dot(xb, packed["w1"], preferred_element_type=jnp.float32)
        + packed["b1"], 0.0)
    h2 = jnp.maximum(
        jnp.dot(h1.astype(jnp.bfloat16), packed["w2"],
                preferred_element_type=jnp.float32), 0.0)
    return jnp.dot(h2.astype(jnp.bfloat16), packed["w3"],
                   preferred_element_type=jnp.float32)


# -----------------------------------------------------------------------------
# Wrapper: tile the batch, call the kernel, slice the result.
# -----------------------------------------------------------------------------
def value_forward(x, packed, *, block_b=2048, core_parallel=False,
                  vmem_budget_bytes=24 * 1024 * 1024, min_pallas_rows=0):
    """x: (B, state_size) float32. packed: output of pack_value_params."""
    B, S = x.shape
    assert S == packed["S"], (S, packed["S"])

    # Tiny batches are 100% fixed overhead in pallas — optional jnp early-out.
    if B < min_pallas_rows:
        return _value_forward_jnp(x.astype(jnp.float32), packed)

    x = x.astype(jnp.float32)

    # Batch-tile sizing.  Per-grid-step fixed overhead is ~0.35 us, so large
    # tiles win; cap them so the per-step VMEM (double-buffered x / out blocks,
    # lane-padded to 128, plus f32+bf16 h1/h2 temporaries) stays well inside
    # v7x's smaller scoped-VMEM budget.
    bytes_per_row = (2 * 128 * 4          # x block (lane-padded), 2 buffers
                     + 2 * 128 * 4        # out block (lane-padded), 2 buffers
                     + 128 * (4 + 2 + 4 + 2))   # h1/h2 f32 + bf16 temporaries
    tb_cap = max(128, (vmem_budget_bytes // bytes_per_row) // 128 * 128)
    block_b = min(_round_up(block_b, 128), tb_cap)

    if B <= block_b:
        TB = _round_up(max(B, 1), 8)      # single tile: f32 sublane granule
        B_pad = TB
    else:
        TB = block_b
        B_pad = _round_up(B, TB)
    n_tiles = B_pad // TB

    # Only row padding (zeros) when needed; no column padding of the state.
    x_in = x if B_pad == B else jnp.pad(x, ((0, B_pad - B), (0, 0)))

    w1, w2, w3, b1 = packed["w1"], packed["w2"], packed["w3"], packed["b1"]

    flops = 2 * B_pad * (S * H_PAD + H_PAD * H_PAD + H_PAD)
    bytes_accessed = (x_in.size * 4 + w1.size * 2 + w2.size * 2 +
                      w3.size * 2 + b1.size * 4 + B_pad * 4)

    # "parallel" is correct everywhere; CORE_PARALLEL shards the batch axis
    # across v7x's 2 TensorCores (no effect on single-TC v5e/v6e).
    semantics = (pltpu.CORE_PARALLEL,) if core_parallel else ("parallel",)

    out = pl.pallas_call(
        value_mlp_kernel,
        out_shape=jax.ShapeDtypeStruct((B_pad, 1), jnp.float32),
        grid_spec=pltpu.PrefetchScalarGridSpec(
            num_scalar_prefetch=0,
            grid=(n_tiles,),
            in_specs=[
                # x: pipelined / double-buffered batch tiles, natural width
                pl.BlockSpec((TB, S), lambda i: (i, 0)),
                # weights / bias: constant index_map -> DMA'd once, resident
                pl.BlockSpec((S, H_PAD), lambda i: (0, 0)),
                pl.BlockSpec((H_PAD, H_PAD), lambda i: (0, 0)),
                pl.BlockSpec((H_PAD, 1), lambda i: (0, 0)),
                pl.BlockSpec((1, H_PAD), lambda i: (0, 0)),
            ],
            out_specs=pl.BlockSpec((TB, 1), lambda i: (i, 0)),
        ),
        compiler_params=pltpu.CompilerParams(
            dimension_semantics=semantics,
            vmem_limit_bytes=32 * 1024 * 1024),
        cost_estimate=pl.CostEstimate(
            flops=flops, transcendentals=0, bytes_accessed=bytes_accessed),
    )(x_in, w1, w2, w3, b1)

    return out[:B]


# -----------------------------------------------------------------------------
# Parameter init (mirrors layer_init: orthogonal weight * scale, zero bias)
# and packing into padded / bias-folded kernel slabs.
# -----------------------------------------------------------------------------
def orthogonal(key, out_features, in_features, scale=1.0, dtype=jnp.float32):
    a = jax.random.normal(key, (out_features, in_features), dtype=jnp.float32)
    rows, cols = a.shape
    transpose = rows < cols
    if transpose:
        a = a.T
    q, r = jnp.linalg.qr(a)
    d = jnp.sign(jnp.diagonal(r))
    q = q * d[None, :]
    if transpose:
        q = q.T
    return (scale * q).astype(dtype)


def init_value_params(state_size, seed=0):
    """Reference-layout params (weights stored transposed: (in, out))."""
    k1, k2, k3 = jax.random.split(jax.random.PRNGKey(seed), 3)
    w1 = orthogonal(k1, 30, state_size, 1.0)      # (30, S)  PyTorch layout
    w2 = orthogonal(k2, 30, 30, 1.0)
    w3 = orthogonal(k3, 1, 30, 0.001)
    return {
        "w1": w1.T, "b1": jnp.zeros((1, 30), jnp.float32),
        "w2": w2.T, "b2": jnp.zeros((1, 30), jnp.float32),
        "w3": w3.T, "b3": jnp.zeros((1, 1), jnp.float32),
    }


def pack_value_params(params):
    """Pad hidden 30->128, keep the state axis at natural width, fold b2/b3.

    b1 is an explicit f32 row added in-kernel; b1[ONE_COL] = 1.0 forces
    h1[:, ONE_COL] == 1 exactly (ReLU(1)=1, 1.0 exact in bf16), so b2 rides
    row ONE_COL of w2 and b3 rides row ONE_COL of the w3 column.  Zero
    padding elsewhere is exact.
    """
    w1 = params["w1"].astype(jnp.float32)              # (S, 30)
    b1 = params["b1"].reshape(-1).astype(jnp.float32)  # (30,)
    w2 = params["w2"].astype(jnp.float32)              # (30, 30)
    b2 = params["b2"].reshape(-1).astype(jnp.float32)  # (30,)
    w3 = params["w3"].reshape(-1).astype(jnp.float32)  # (30,)
    b3 = params["b3"].reshape(()).astype(jnp.float32)

    S = w1.shape[0]

    w1p = jnp.zeros((S, H_PAD), jnp.float32)
    w1p = w1p.at[:, :HIDDEN].set(w1)

    b1p = jnp.zeros((1, H_PAD), jnp.float32)
    b1p = b1p.at[0, :HIDDEN].set(b1)
    b1p = b1p.at[0, ONE_COL].set(1.0)                  # makes h1[:,ONE_COL]==1

    w2p = jnp.zeros((H_PAD, H_PAD), jnp.float32)
    w2p = w2p.at[:HIDDEN, :HIDDEN].set(w2)
    w2p = w2p.at[ONE_COL, :HIDDEN].set(b2)             # fc2 bias
    w2p = w2p.at[ONE_COL, ONE_COL].set(1.0)            # makes h2[:,ONE_COL]==1

    w3p = jnp.zeros((H_PAD, 1), jnp.float32)
    w3p = w3p.at[:HIDDEN, 0].set(w3)
    w3p = w3p.at[ONE_COL, 0].set(b3)                   # value bias

    return {
        "w1": w1p.astype(jnp.bfloat16),
        "w2": w2p.astype(jnp.bfloat16),
        "w3": w3p.astype(jnp.bfloat16),
        "b1": b1p,                                     # bias row stays f32
        "S": S,
    }


# -----------------------------------------------------------------------------
# Pure-JAX references.
# -----------------------------------------------------------------------------
def value_forward_ref(x, params):
    h1 = jnp.maximum(x @ params["w1"] + params["b1"], 0.0)
    h2 = jnp.maximum(h1 @ params["w2"] + params["b2"], 0.0)
    return h2 @ params["w3"] + params["b3"]


def value_forward_ref_bf16(x, params):
    """Reference matching the kernel's bf16-rounded matmul inputs."""
    hi = jax.lax.Precision.HIGHEST
    r = lambda a: a.astype(jnp.bfloat16).astype(jnp.float32)
    h1 = jnp.maximum(
        jnp.matmul(r(x), r(params["w1"]), precision=hi)
        + params["b1"].astype(jnp.float32), 0.0)
    h2 = jnp.maximum(
        jnp.matmul(r(h1), r(params["w2"]), precision=hi) + r(params["b2"]), 0.0)
    return jnp.matmul(r(h2), r(params["w3"]), precision=hi) + r(params["b3"])


if __name__ == "__main__":
    state_size = 8
    batch = 2

    params = init_value_params(state_size, seed=0)
    packed = pack_value_params(params)

    # --- small-batch check (module-faithful init, pallas path) ---
    x = jax.random.normal(jax.random.PRNGKey(0), (batch, state_size),
                          dtype=jnp.float32)
    out = jax.block_until_ready(value_forward(x, packed))
    assert out.shape == (batch, 1), out.shape
    ref_b = value_forward_ref_bf16(x, params)
    ref_f = value_forward_ref(x, params)
    assert jnp.allclose(out, ref_b, atol=5e-5, rtol=1e-3), (out, ref_b)
    assert jnp.allclose(out, ref_f, atol=2e-3, rtol=5e-2), (out, ref_f)

    # --- non-zero biases: validates the in-kernel b1 add + b2/b3 folds ---
    kb1, kb2, kb3 = jax.random.split(jax.random.PRNGKey(7), 3)
    params_b = dict(params)
    params_b["b1"] = 0.1 * jax.random.normal(kb1, (1, 30), jnp.float32)
    params_b["b2"] = 0.1 * jax.random.normal(kb2, (1, 30), jnp.float32)
    params_b["b3"] = 0.1 * jax.random.normal(kb3, (1, 1), jnp.float32)
    packed_b = pack_value_params(params_b)
    out_b = jax.block_until_ready(value_forward(x, packed_b))
    ref_bb = value_forward_ref_bf16(x, params_b)
    assert jnp.allclose(out_b, ref_bb, atol=5e-5, rtol=1e-3), (out_b, ref_bb)

    # --- multi-tile (grid > 1) batched path, non-divisible batch ---
    xm = jax.random.normal(jax.random.PRNGKey(1), (1037, state_size),
                           dtype=jnp.float32)
    out_mt = jax.block_until_ready(value_forward(xm, packed, block_b=256))
    ref_mt = value_forward_ref_bf16(xm, params)
    assert out_mt.shape == (1037, 1), out_mt.shape
    assert jnp.allclose(out_mt, ref_mt, atol=5e-5, rtol=1e-3)

    # --- large batch through the default (big-tile) path ---
    xl = jax.random.normal(jax.random.PRNGKey(2), (5000, state_size),
                           dtype=jnp.float32)
    out_l = jax.block_until_ready(value_forward(xl, packed))
    ref_l = value_forward_ref_bf16(xl, params)
    assert out_l.shape == (5000, 1), out_l.shape
    assert jnp.allclose(out_l, ref_l, atol=5e-5, rtol=1e-3)

    # --- tiny-batch jnp fallback path matches the kernel numerics ---
    out_fb = jax.block_until_ready(
        value_forward(x, packed, min_pallas_rows=64))
    assert jnp.allclose(out_fb, ref_b, atol=5e-5, rtol=1e-3), (out_fb, ref_b)

    print("KERNEL_OK")
</pallas_src>

<mosaic_0001>
module attributes {stable_mosaic.version = 11 : i64} {
  func.func @value_mlp_kernel(%arg0: i32, %arg1: memref<8x8xf32, #tpu.memory_space<vmem>>, %arg2: memref<8x128xbf16, #tpu.memory_space<vmem>>, %arg3: memref<128x128xbf16, #tpu.memory_space<vmem>>, %arg4: memref<128x1xbf16, #tpu.memory_space<vmem>>, %arg5: memref<1x128xf32, #tpu.memory_space<vmem>>, %arg6: memref<8x1xf32, #tpu.memory_space<vmem>>) attributes {dimension_semantics = [#tpu.dimension_semantics<parallel>], iteration_bounds = array<i64: 1>, scalar_prefetch = 0 : i64, scratch_operands = 0 : i64, tpu.core_type = #tpu.core_type<tc>, window_params = [{transform_indices = @transform_0, window_bounds = array<i64: 8, 8>}, {pipeline_mode = #tpu.pipeline_mode<synchronous>, transform_indices = @transform_1, window_bounds = array<i64: 8, 128>}, {pipeline_mode = #tpu.pipeline_mode<synchronous>, transform_indices = @transform_2, window_bounds = array<i64: 128, 128>}, {pipeline_mode = #tpu.pipeline_mode<synchronous>, transform_indices = @transform_3, window_bounds = array<i64: 128, 1>}, {pipeline_mode = #tpu.pipeline_mode<synchronous>, transform_indices = @transform_4, window_bounds = array<i64: 1, 128>}, {transform_indices = @transform_5, window_bounds = array<i64: 8, 1>}]} {
    %c0 = arith.constant 0 : index
    %c0_0 = arith.constant 0 : index
    %0 = vector.load %arg1[%c0, %c0_0] : memref<8x8xf32, #tpu.memory_space<vmem>>, vector<8x8xf32>
    %1 = arith.truncf %0 : vector<8x8xf32> to vector<8x8xbf16>
    %c0_1 = arith.constant 0 : index
    %c0_2 = arith.constant 0 : index
    %2 = vector.load %arg2[%c0_1, %c0_2] : memref<8x128xbf16, #tpu.memory_space<vmem>>, vector<8x128xbf16>
    %cst = arith.constant dense<0.000000e+00> : vector<8x128xf32>
    %3 = tpu.matmul %1, %2, %cst {dimension_numbers = #tpu.dot_dimension_numbers<[1], [0], [0], [1], [0, 0, 1, 1], [], []>} : vector<8x8xbf16>, vector<8x128xbf16>, vector<8x128xf32> -> vector<8x128xf32>
    %c0_3 = arith.constant 0 : index
    %c0_4 = arith.constant 0 : index
    %4 = vector.load %arg5[%c0_3, %c0_4] : memref<1x128xf32, #tpu.memory_space<vmem>>, vector<1x128xf32>
    %5 = vector.broadcast %4 : vector<1x128xf32> to vector<8x128xf32>
    %6 = arith.addf %3, %5 : vector<8x128xf32>
    %cst_5 = arith.constant 0.000000e+00 : f32
    %7 = vector.broadcast %cst_5 : f32 to vector<8x128xf32>
    %8 = arith.maximumf %6, %7 : vector<8x128xf32>
    %9 = arith.truncf %8 : vector<8x128xf32> to vector<8x128xbf16>
    %c0_6 = arith.constant 0 : index
    %c0_7 = arith.constant 0 : index
    %10 = vector.load %arg3[%c0_6, %c0_7] : memref<128x128xbf16, #tpu.memory_space<vmem>>, vector<128x128xbf16>
    %cst_8 = arith.constant dense<0.000000e+00> : vector<8x128xf32>
    %11 = tpu.matmul %9, %10, %cst_8 {dimension_numbers = #tpu.dot_dimension_numbers<[1], [0], [0], [1], [0, 0, 1, 1], [], []>} : vector<8x128xbf16>, vector<128x128xbf16>, vector<8x128xf32> -> vector<8x128xf32>
    %cst_9 = arith.constant 0.000000e+00 : f32
    %12 = vector.broadcast %cst_9 : f32 to vector<8x128xf32>
    %13 = arith.maximumf %11, %12 : vector<8x128xf32>
    %14 = arith.truncf %13 : vector<8x128xf32> to vector<8x128xbf16>
    %c0_10 = arith.constant 0 : index
    %c0_11 = arith.constant 0 : index
    %15 = vector.load %arg4[%c0_10, %c0_11] : memref<128x1xbf16, #tpu.memory_space<vmem>>, vector<128x1xbf16>
    %cst_12 = arith.constant dense<0.000000e+00> : vector<8x1xf32>
    %16 = tpu.matmul %14, %15, %cst_12 {dimension_numbers = #tpu.dot_dimension_numbers<[1], [0], [0], [1], [0, 0, 1, 1], [], []>} : vector<8x128xbf16>, vector<128x1xbf16>, vector<8x1xf32> -> vector<8x1xf32>
    %c0_13 = arith.constant 0 : index
    %c0_14 = arith.constant 0 : index
    %17 = vector.load %arg6[%c0_13, %c0_14] : memref<8x1xf32, #tpu.memory_space<vmem>>, vector<8x1xf32>
    tpu.vector_store %arg6[%c0_13, %c0_14], %16 {strides = array<i32>} : memref<8x1xf32, #tpu.memory_space<vmem>>, vector<8x1xf32>,
    return
  }
  func.func @transform_0(%arg0: i32) -> (i32, i32) {
    %c0_i32 = arith.constant 0 : i32
    %c0_i32_0 = arith.constant 0 : i32
    return %arg0, %c0_i32 : i32, i32
  }
  func.func @transform_1(%arg0: i32) -> (i32, i32) {
    %c0_i32 = arith.constant 0 : i32
    %c0_i32_0 = arith.constant 0 : i32
    %c0_i32_1 = arith.constant 0 : i32
    return %c0_i32, %c0_i32_0 : i32, i32
  }
  func.func @transform_2(%arg0: i32) -> (i32, i32) {
    %c0_i32 = arith.constant 0 : i32
    %c0_i32_0 = arith.constant 0 : i32
    %c0_i32_1 = arith.constant 0 : i32
    return %c0_i32, %c0_i32_0 : i32, i32
  }
  func.func @transform_3(%arg0: i32) -> (i32, i32) {
    %c0_i32 = arith.constant 0 : i32
    %c0_i32_0 = arith.constant 0 : i32
    %c0_i32_1 = arith.constant 0 : i32
    return %c0_i32, %c0_i32_0 : i32, i32
  }
  func.func @transform_4(%arg0: i32) -> (i32, i32) {
    %c0_i32 = arith.constant 0 : i32
    %c0_i32_0 = arith.constant 0 : i32
    %c0_i32_1 = arith.constant 0 : i32
    return %c0_i32, %c0_i32_0 : i32, i32
  }
  func.func @transform_5(%arg0: i32) -> (i32, i32) {
    %c0_i32 = arith.constant 0 : i32
    %c0_i32_0 = arith.constant 0 : i32
    return %arg0, %c0_i32 : i32, i32
  }
}

</mosaic_0001>

<llo_original>
// kernel: tpu_custom_call.1
$region0: #{tpu_custom_call.1}
  #allocation0 [shape = 'u32[]', space=smem, size = 0x4, offset = 0x4, fixed_abs, tag = 'smem constant byte address 0x4 - core index']
  #allocation1 [shape = 'u32[144,128]{1,0:T(1,128)}', space=vmem, size = 0x12000, scoped, tag = 'internal scratch']
  %s0 = inlined_call_operand.vmem [shape: f32[8,8], index: 0, kind: input, shape index: {}]
  %s1 = inlined_call_operand.hbm [shape: bf16[8,128], index: 1, kind: input, shape index: {}]
  %s2 = inlined_call_operand.vmem [shape: bf16[128,128], index: 2, kind: input, shape index: {}]
  %s3 = inlined_call_operand.vmem [shape: bf16[128,1], index: 3, kind: input, shape index: {}]
  %s4 = inlined_call_operand.vmem [shape: f32[1,128], index: 4, kind: input, shape index: {}]
  %s5 = inlined_call_operand.vmem [shape: f32[8,1], index: 5, kind: output, shape index: {}]
  %s6 = sld [smem:[#allocation0]]
  $region34: #{tpu_custom_call.1} parent=0
    _
  %s8 = ssub.s32 1, %s6
  %s9 = scalar_select 0, %s8, %s6
  $region1: #{tpu_custom_call.1} parent=0
    #allocation2 [shape = 'u8[2048]{0}', space=vmem, size = 0x800, scoped, tag = 'input window, operand 1, single buffered']
    #allocation3 [shape = 's32[1]{0}', space=sflag, size = 0x4, scoped, tag = 'scoped memory for tpu_custom_call.1']
    %10 = vsyncpa [#allocation3], 0
    // Predicated region
    $region2: #{tpu_custom_call.1} parent=1 // pred_check
      _
    $region3: #{tpu_custom_call.1} parent=1 // pred_check_branch
      %12 = sbr.rel (0) target = $region5
    $region4: #{tpu_custom_call.1} parent=1 // pred_region
      _
    $region5: #{tpu_custom_call.1} parent=1 // pred_fallthru
      _
    // Predicated region
    $region6: #{tpu_custom_call.1} parent=1 // pred_check
      _
    $region7: #{tpu_custom_call.1} parent=1 // pred_check_branch
      %14 = sbr.rel (0) target = $region9
    $region8: #{tpu_custom_call.1} parent=1 // pred_region
      %s16 = ssub.s32 64, 64
      %17 = vsyncadd [#allocation3], %s16
      %s19 = sshll.u32 [#allocation2], 4
      %s20 = int_to_ptr.vmem [resolvable:$true] %s19
      %22 = dma.hbm_to_vmem [thread:$0]  %s1, 64, %s20, [#allocation3]
    $region9: #{tpu_custom_call.1} parent=1 // pred_fallthru
      _
    // Predicated region
    $region10: #{tpu_custom_call.1} parent=1 // pred_check
      _
    $region11: #{tpu_custom_call.1} parent=1 // pred_check_branch
      %24 = sbr.rel (0) target = $region13
    $region12: #{tpu_custom_call.1} parent=1 // pred_region
      _
    $region13: #{tpu_custom_call.1} parent=1 // pred_fallthru
      _
    // Predicated region
    $region14: #{tpu_custom_call.1} parent=1 // pred_check
      _
    $region15: #{tpu_custom_call.1} parent=1 // pred_check_branch
      %26 = sbr.rel (0) target = $region17
    $region16: #{tpu_custom_call.1} parent=1 // pred_region
      _
    $region17: #{tpu_custom_call.1} parent=1 // pred_fallthru
      _
    // Predicated region
    $region18: #{tpu_custom_call.1} parent=1 // pred_check
      _
    $region19: #{tpu_custom_call.1} parent=1 // pred_check_branch
      %28 = sbr.rel (0) target = $region21
    $region20: #{tpu_custom_call.1} parent=1 // pred_region
      _
    $region21: #{tpu_custom_call.1} parent=1 // pred_fallthru
      _
    // Predicated region
    $region22: #{tpu_custom_call.1} parent=1 // pred_check
      _
    $region23: #{tpu_custom_call.1} parent=1 // pred_check_branch
      %30 = sbr.rel (0) target = $region25
    $region24: #{tpu_custom_call.1} parent=1 // pred_region
      %31 = dma.done [#allocation3], 64
    $region25: #{tpu_custom_call.1} parent=1 // pred_fallthru
      _
    %v33 = vld [vmem:[%s0] sm:$0xff]
    %v34 = vpack.c.bf16 %v33, %v33
    %v35 = vld [vmem:[#allocation2] sm:$0xf]
    %v36 = vld [vmem:[%s4] sm:$0x1]
    %v38 = vlaneseq
    %v39 = vshrl.u32 %v38, 7
    %v40 = vsub.s32 0, %v39
    %v41 = vrot.slane %v36, %v40
    %vm43 = vcmask 64512
    %v45 = vsel %vm43, %v34, 0
    %vm47 = vcmask 1043456
    %v49 = vsel %vm47, %v35, 0
    %51 = vmatprep.subr.bf16.mxu0 0
    %52 = vmatpush1.bf16.msra.mxu0 %v49
    %53 = vmatprep.subr.bf16.mxu0 0
    %54 = vmatpush1.bf16.msra.mxu0 0
    %55 = vmatprep.subr.bf16.mxu0 0
    %56 = vmatpush1.bf16.msra.mxu0 0
    %57 = vmatprep.subr.bf16.mxu0 0
    %58 = vmatpush1.bf16.msra.mxu0 0
    %59 = vmatprep.subr.bf16.mxu0 0
    %60 = vmatpush1.bf16.msra.mxu0 0
    %61 = vmatprep.subr.bf16.mxu0 0
    %62 = vmatpush1.bf16.msra.mxu0 0
    %63 = vmatprep.subr.bf16.mxu0 0
    %64 = vmatpush1.bf16.msra.mxu0 0
    %65 = vmatprep.subr.bf16.mxu0 0
    %66 = vmatpush1.bf16.msra.mxu0 0
    %67 = vmatprep.subr.bf16.mxu0 0
    %68 = vmatpush1.bf16.msra.mxu0 0
    %69 = vmatprep.subr.bf16.mxu0 0
    %70 = vmatpush1.bf16.msra.mxu0 0
    %71 = vmatprep.subr.bf16.mxu0 0
    %72 = vmatpush1.bf16.msra.mxu0 0
    %73 = vmatprep.subr.bf16.mxu0 0
    %74 = vmatpush1.bf16.msra.mxu0 0
    %75 = vmatprep.subr.bf16.mxu0 0
    %76 = vmatpush1.bf16.msra.mxu0 0
    %77 = vmatprep.subr.bf16.mxu0 0
    %78 = vmatpush1.bf16.msra.mxu0 0
    %79 = vmatprep.subr.bf16.mxu0 0
    %80 = vmatpush1.bf16.msra.mxu0 0
    %81 = vmatprep.subr.bf16.mxu0 0
    %82 = vmatpush1.bf16.msra.mxu0 0
    %83 = vmatprep.mubr.bf16.mxu0 0
    %84 = vmatmul.mubr.bf16.gmra.mrb[0].mxu0 %v45
    %v85 = vpop.f32.mrb[0].mxu0
    %v86 = vadd.f32 %v41, %v85
    %v87 = vpop.f32.mrb[0].mxu0
    %v88 = vpop.f32.mrb[0].mxu0
    %v89 = vpop.f32.mrb[0].mxu0
    %90 = vdwg.mxu0
    %v91 = vmax.f32 %v86, 0.0
    %v92 = vpack.c.bf16 %v91, %v91
    %v93 = vld [vmem:[%s2] sm:$0xf]
    %v94 = vld [vmem:[%s2 + $0x4] sm:$0xf]
    %v95 = vld [vmem:[%s2 + $0x8] sm:$0xf]
    %v96 = vld [vmem:[%s2 + $0xc] sm:$0xf]
    %v97 = vld [vmem:[%s2 + $0x10] sm:$0xf]
    %v98 = vld [vmem:[%s2 + $0x14] sm:$0xf]
    %v99 = vld [vmem:[%s2 + $0x18] sm:$0xf]
    %v100 = vld [vmem:[%s2 + $0x1c] sm:$0xf]
    %v101 = vld [vmem:[%s2 + $0x20] sm:$0xf]
    %v102 = vld [vmem:[%s2 + $0x24] sm:$0xf]
    %v103 = vld [vmem:[%s2 + $0x28] sm:$0xf]
    %v104 = vld [vmem:[%s2 + $0x2c] sm:$0xf]
    %v105 = vld [vmem:[%s2 + $0x30] sm:$0xf]
    %v106 = vld [vmem:[%s2 + $0x34] sm:$0xf]
    %v107 = vld [vmem:[%s2 + $0x38] sm:$0xf]
    %v108 = vld [vmem:[%s2 + $0x3c] sm:$0xf]
    %v125 = vunpack.c.l.b16 %v93
    %v126 = vunpack.c.l.b16 %v94
    %v127 = vunpack.c.l.b16 %v95
    %v128 = vunpack.c.l.b16 %v96
    %v129 = vunpack.c.l.b16 %v97
    %v130 = vunpack.c.l.b16 %v98
    %v131 = vunpack.c.l.b16 %v99
    %v132 = vunpack.c.l.b16 %v100
    %v133 = vunpack.c.l.b16 %v101
    %v134 = vunpack.c.l.b16 %v102
    %v135 = vunpack.c.l.b16 %v103
    %v136 = vunpack.c.l.b16 %v104
    %v137 = vunpack.c.l.b16 %v105
    %v138 = vunpack.c.l.b16 %v106
    %v139 = vunpack.c.l.b16 %v107
    %v140 = vunpack.c.l.b16 %v108
    %v141 = vpack.c.b16 %v126, %v125
    %v142 = vpack.c.b16 %v128, %v127
    %v143 = vpack.c.b16 %v130, %v129
    %v144 = vpack.c.b16 %v132, %v131
    %v145 = vpack.c.b16 %v134, %v133
    %v146 = vpack.c.b16 %v136, %v135
    %v147 = vpack.c.b16 %v138, %v137
    %v148 = vpack.c.b16 %v140, %v139
    %157 = vmatprep.subr.bf16.mxu0 0
    %158 = vmatpush1.bf16.msra.mxu0 %v141
    %159 = vmatprep.subr.bf16.mxu0 0
    %160 = vmatpush1.bf16.msra.mxu0 %v142
    %161 = vmatprep.subr.bf16.mxu0 0
    %162 = vmatpush1.bf16.msra.mxu0 %v143
    %163 = vmatprep.subr.bf16.mxu0 0
    %164 = vmatpush1.bf16.msra.mxu0 %v144
    %165 = vmatprep.subr.bf16.mxu0 0
    %166 = vmatpush1.bf16.msra.mxu0 %v145
    %167 = vmatprep.subr.bf16.mxu0 0
    %168 = vmatpush1.bf16.msra.mxu0 %v146
    %169 = vmatprep.subr.bf16.mxu0 0
    %170 = vmatpush1.bf16.msra.mxu0 %v147
    %171 = vmatprep.subr.bf16.mxu0 0
    %172 = vmatpush1.bf16.msra.mxu0 %v148
    %173 = vmatprep.subr.bf16.mxu0 0
    %174 = vmatpush1.bf16.msra.mxu0 0
    %175 = vmatprep.subr.bf16.mxu0 0
    %176 = vmatpush1.bf16.msra.mxu0 0
    %177 = vmatprep.subr.bf16.mxu0 0
    %178 = vmatpush1.bf16.msra.mxu0 0
    %179 = vmatprep.subr.bf16.mxu0 0
    %180 = vmatpush1.bf16.msra.mxu0 0
    %181 = vmatprep.subr.bf16.mxu0 0
    %182 = vmatpush1.bf16.msra.mxu0 0
    %183 = vmatprep.subr.bf16.mxu0 0
    %184 = vmatpush1.bf16.msra.mxu0 0
    %185 = vmatprep.subr.bf16.mxu0 0
    %186 = vmatpush1.bf16.msra.mxu0 0
    %187 = vmatprep.subr.bf16.mxu0 0
    %188 = vmatpush1.bf16.msra.mxu0 0
    %189 = vmatprep.mubr.bf16.mxu0 0
    %190 = vmatmul.mubr.bf16.gmra.mrb[0].mxu0 %v92
    %v191 = vpop.f32.mrb[0].mxu0
    %v192 = vadd.f32 0.0, %v191
    %v193 = vpop.f32.mrb[0].mxu0
    %v194 = vpop.f32.mrb[0].mxu0
    %v195 = vpop.f32.mrb[0].mxu0
    %196 = vdwg.mxu0
    %v197 = vmax.f32 %v192, 0.0
    %v198 = vpack.c.bf16 %v197, %v197
    %v199 = vld [vmem:[%s3] sm:$0xf]
    %v200 = vld [vmem:[%s3 + $0x4] sm:$0xf]
    %v201 = vld [vmem:[%s3 + $0x8] sm:$0xf]
    %v202 = vld [vmem:[%s3 + $0xc] sm:$0xf]
    %v203 = vld [vmem:[%s3 + $0x10] sm:$0xf]
    %v204 = vld [vmem:[%s3 + $0x14] sm:$0xf]
    %v205 = vld [vmem:[%s3 + $0x18] sm:$0xf]
    %v206 = vld [vmem:[%s3 + $0x1c] sm:$0xf]
    %v207 = vld [vmem:[%s3 + $0x20] sm:$0xf]
    %v208 = vld [vmem:[%s3 + $0x24] sm:$0xf]
    %v209 = vld [vmem:[%s3 + $0x28] sm:$0xf]
    %v210 = vld [vmem:[%s3 + $0x2c] sm:$0xf]
    %v211 = vld [vmem:[%s3 + $0x30] sm:$0xf]
    %v212 = vld [vmem:[%s3 + $0x34] sm:$0xf]
    %v213 = vld [vmem:[%s3 + $0x38] sm:$0xf]
    %v214 = vld [vmem:[%s3 + $0x3c] sm:$0xf]
    %v231 = vunpack.c.l.b16 %v199
    %v232 = vunpack.c.l.b16 %v200
    %v233 = vunpack.c.l.b16 %v201
    %v234 = vunpack.c.l.b16 %v202
    %v235 = vunpack.c.l.b16 %v203
    %v236 = vunpack.c.l.b16 %v204
    %v237 = vunpack.c.l.b16 %v205
    %v238 = vunpack.c.l.b16 %v206
    %v239 = vunpack.c.l.b16 %v207
    %v240 = vunpack.c.l.b16 %v208
    %v241 = vunpack.c.l.b16 %v209
    %v242 = vunpack.c.l.b16 %v210
    %v243 = vunpack.c.l.b16 %v211
    %v244 = vunpack.c.l.b16 %v212
    %v245 = vunpack.c.l.b16 %v213
    %v246 = vunpack.c.l.b16 %v214
    %v247 = vpack.c.b16 %v232, %v231
    %v248 = vpack.c.b16 %v234, %v233
    %v249 = vpack.c.b16 %v236, %v235
    %v250 = vpack.c.b16 %v238, %v237
    %v251 = vpack.c.b16 %v240, %v239
    %v252 = vpack.c.b16 %v242, %v241
    %v253 = vpack.c.b16 %v244, %v243
    %v254 = vpack.c.b16 %v246, %v245
    %263 = vmatprep.subr.bf16.mxu0 0
    %264 = vmatpush1.bf16.msra.mxu0 %v247
    %265 = vmatprep.subr.bf16.mxu0 0
    %266 = vmatpush1.bf16.msra.mxu0 %v248
    %267 = vmatprep.subr.bf16.mxu0 0
    %268 = vmatpush1.bf16.msra.mxu0 %v249
    %269 = vmatprep.subr.bf16.mxu0 0
    %270 = vmatpush1.bf16.msra.mxu0 %v250
    %271 = vmatprep.subr.bf16.mxu0 0
    %272 = vmatpush1.bf16.msra.mxu0 %v251
    %273 = vmatprep.subr.bf16.mxu0 0
    %274 = vmatpush1.bf16.msra.mxu0 %v252
    %275 = vmatprep.subr.bf16.mxu0 0
    %276 = vmatpush1.bf16.msra.mxu0 %v253
    %277 = vmatprep.subr.bf16.mxu0 0
    %278 = vmatpush1.bf16.msra.mxu0 %v254
    %279 = vmatprep.subr.bf16.mxu0 0
    %280 = vmatpush1.bf16.msra.mxu0 0
    %281 = vmatprep.subr.bf16.mxu0 0
    %282 = vmatpush1.bf16.msra.mxu0 0
    %283 = vmatprep.subr.bf16.mxu0 0
    %284 = vmatpush1.bf16.msra.mxu0 0
    %285 = vmatprep.subr.bf16.mxu0 0
    %286 = vmatpush1.bf16.msra.mxu0 0
    %287 = vmatprep.subr.bf16.mxu0 0
    %288 = vmatpush1.bf16.msra.mxu0 0
    %289 = vmatprep.subr.bf16.mxu0 0
    %290 = vmatpush1.bf16.msra.mxu0 0
    %291 = vmatprep.subr.bf16.mxu0 0
    %292 = vmatpush1.bf16.msra.mxu0 0
    %293 = vmatprep.subr.bf16.mxu0 0
    %294 = vmatpush1.bf16.msra.mxu0 0
    %295 = vmatprep.mubr.bf16.mxu0 0
    %296 = vmatmul.mubr.bf16.gmra.mrb[0].mxu0 %v198
    %v297 = vpop.f32.mrb[0].mxu0
    %v298 = vadd.f32 0.0, %v297
    %v299 = vpop.f32.mrb[0].mxu0
    %v300 = vpop.f32.mrb[0].mxu0
    %v301 = vpop.f32.mrb[0].mxu0
    %302 = vdwg.mxu0
    %vm303 = vcmask 7168
    %304 = vst.msk [vmem:[%s5] sm:$0xff] %vm303, %v298
    // Predicated region
    $region26: #{tpu_custom_call.1} parent=1 // pred_check
      _
    $region27: #{tpu_custom_call.1} parent=1 // pred_check_branch
      %306 = sbr.rel (0) target = $region29
    $region28: #{tpu_custom_call.1} parent=1 // pred_region
      _
    $region29: #{tpu_custom_call.1} parent=1 // pred_fallthru
      _
    // Predicated region
    $region30: #{tpu_custom_call.1} parent=1 // pred_check
      _
    $region31: #{tpu_custom_call.1} parent=1 // pred_check_branch
      %308 = sbr.rel (0) target = $region33
    $region32: #{tpu_custom_call.1} parent=1 // pred_region
      _
    $region33: #{tpu_custom_call.1} parent=1 // pred_fallthru
      _
    %309 = vsyncpa [#allocation3], 1

</llo_original>
